<compile_context>
chip_gen: v5e
topology: v5e:2x2
jax: 0.10.0
libtpu: 0.0.40
codegen_flags: <defaults>
</compile_context>

<pallas_src>
import numpy as np
import jax
import jax.numpy as jnp
from jax.experimental import pallas as pl
from jax.experimental.pallas import tpu as pltpu


def _vmem_budget_bytes():
    """Scoped-VMEM budget: ~3/4 of physical, capped at 96 MiB.
    -> 96 MiB on 128-MiB v5e/v6e, 48 MiB on 64-MiB v7x; 48 MiB fallback."""
    try:
        cap = pltpu.get_tpu_info().vmem_capacity_bytes
    except Exception:
        cap = 64 * 1024 * 1024
    return int(min(cap * 3 // 4, 96 * 1024 * 1024))


# ---------------- Kernel 1: fused folded projection (tiled MXU matmul) ------
def _proj_kernel_f32(x_ref, w_ref, b_ref, o_ref):
    # f32 output: accumulate directly into the resident output block (its
    # block index is constant across the innermost k axis) -- no scratch.
    @pl.when(pl.program_id(2) == 0)
    def _():
        o_ref[...] = jnp.broadcast_to(b_ref[...], o_ref.shape)

    o_ref[...] += jnp.dot(x_ref[...], w_ref[...],
                          preferred_element_type=jnp.float32)


def _proj_kernel_lowp(x_ref, w_ref, b_ref, o_ref, acc_ref):
    # Low-precision (e.g. bf16) output: f32 scratch accumulator, bias-add and
    # downcast on the last k step.
    @pl.when(pl.program_id(2) == 0)
    def _():
        acc_ref[...] = jnp.zeros_like(acc_ref)

    acc_ref[...] += jnp.dot(x_ref[...], w_ref[...],
                            preferred_element_type=jnp.float32)

    @pl.when(pl.program_id(2) == pl.num_programs(2) - 1)
    def _():
        o_ref[...] = (acc_ref[...] + b_ref[...]).astype(o_ref.dtype)


def _pick_tile(dim, target, align):
    """Largest `align`-multiple divisor of `dim` <= target, else full dim."""
    if dim <= target:
        return dim
    t = (target // align) * align
    while t >= align:
        if dim % t == 0:
            return t
        t -= align
    return dim  # no aligned divisor: fall back to the full (untiled) dim


def fused_linear(x2d, w_cat, b_cat):
    """(M, K) @ (K, N) + (1, N) as a tiled, software-pipelined MXU matmul."""
    M, K = x2d.shape
    K2, N = w_cat.shape
    assert K == K2 and b_cat.shape == (1, N)
    out_dtype = x2d.dtype
    tm = _pick_tile(M, 512, 8)
    tk = _pick_tile(K, 512, 128)
    tn = _pick_tile(N, 512, 128)
    grid = (M // tm, N // tn, K // tk)

    f32_out = out_dtype == jnp.float32
    kernel = _proj_kernel_f32 if f32_out else _proj_kernel_lowp
    scratch = [] if f32_out else [pltpu.VMEM((tm, tn), jnp.float32)]

    return pl.pallas_call(
        kernel,
        out_shape=jax.ShapeDtypeStruct((M, N), out_dtype),
        grid=grid,
        in_specs=[
            pl.BlockSpec((tm, tk), lambda i, j, k: (i, k)),
            pl.BlockSpec((tk, tn), lambda i, j, k: (k, j)),
            pl.BlockSpec((1, tn), lambda i, j, k: (0, j)),
        ],
        out_specs=pl.BlockSpec((tm, tn), lambda i, j, k: (i, j)),
        scratch_shapes=scratch,
        compiler_params=pltpu.CompilerParams(
            dimension_semantics=("parallel", "parallel", "arbitrary"),
            vmem_limit_bytes=_vmem_budget_bytes(),
        ),
    )(x2d, w_cat, b_cat)


# ---------------- Kernel 2: span gather + combine + tanh --------------------
def _make_span_kernel(TP, H, split):
    """TP pairs per grid step.  Start rows hold [A|C] = [W1h+W3h | W4h], end
    rows hold [B|C] = [W2h-W3h | W4h], so span = A_s + B_e + C_s*C_e.
    Slices are taken directly from the refs (small live ranges); the TP
    results are emitted with one dense (B, TP, H) store."""
    def kernel(s_tbl, e_tbl, *refs):
        del s_tbl, e_tbl                       # used only by the index maps
        start_refs = refs[:TP]                 # TP x (1, B, CW) at start[p]
        end_refs = refs[TP:2 * TP]             # TP x (1, B, CW) at end[p]
        o_ref = refs[2 * TP]                   # (B, TP, H) output block
        eo = 0 if split else 2 * H             # end-feature column offset
        vals = []
        for t in range(TP):
            a_s = start_refs[t][0, :, 0:H].astype(jnp.float32)
            c_s = start_refs[t][0, :, H:2 * H].astype(jnp.float32)
            b_e = end_refs[t][0, :, eo:eo + H].astype(jnp.float32)
            c_e = end_refs[t][0, :, eo + H:eo + 2 * H].astype(jnp.float32)
            vals.append((a_s + b_e + c_s * c_e)[:, None, :])
        o_ref[...] = jnp.tanh(jnp.concatenate(vals, axis=1)).astype(o_ref.dtype)
    return kernel


def span_classifier(proj_sbc, start_np, end_np, out_dtype, pairs_per_block=8):
    """proj_sbc: (S, B, 4H) folded projection, seq-major.  Returns (B, P, H)."""
    S, B, C = proj_sbc.shape
    H = C // 4
    P = int(start_np.shape[0])

    # Gather only the 2H-wide start/end half when it is lane-aligned
    # (2H % 128 == 0); otherwise fall back to full-4H rows (still correct).
    split = (2 * H) % 128 == 0
    CW = 2 * H if split else C
    end_col_block = 1 if split else 0

    TP = pairs_per_block if P >= pairs_per_block else P
    n_blocks = (P + TP - 1) // TP
    P_pad = n_blocks * TP

    # Edge-pad the index tables so the masked overhang of the last output
    # block still gathers in-bounds projection rows.
    # TODO(synk): for very long sequences, derive indices arithmetically (or
    # DMA table chunks) instead of O(length^2) scalar-prefetch SMEM tables.
    start_pad = jnp.asarray(np.pad(start_np, (0, P_pad - P), mode="edge"),
                            dtype=jnp.int32)
    end_pad = jnp.asarray(np.pad(end_np, (0, P_pad - P), mode="edge"),
                          dtype=jnp.int32)

    def start_map(t):
        return lambda pb, s, e: (s[pb * TP + t], 0, 0)

    def end_map(t):
        return lambda pb, s, e: (e[pb * TP + t], 0, end_col_block)

    # TODO(synk): if traces show exposed gather latency, add
    # pipeline_mode=pl.Buffered(3) on the end-feature specs.
    in_specs = ([pl.BlockSpec((1, B, CW), start_map(t)) for t in range(TP)]
                + [pl.BlockSpec((1, B, CW), end_map(t)) for t in range(TP)])

    grid_spec = pltpu.PrefetchScalarGridSpec(
        num_scalar_prefetch=2,
        grid=(n_blocks,),
        in_specs=in_specs,
        out_specs=pl.BlockSpec((B, TP, H), lambda pb, s, e: (0, pb, 0)),
    )
    return pl.pallas_call(
        _make_span_kernel(TP, H, split),
        grid_spec=grid_spec,
        out_shape=jax.ShapeDtypeStruct((B, P, H), out_dtype),
        compiler_params=pltpu.CompilerParams(
            dimension_semantics=("parallel",),
            vmem_limit_bytes=_vmem_budget_bytes(),
        ),
    )(start_pad, end_pad, *([proj_sbc] * (2 * TP)))


# ---------------- SICModel wrapper ------------------------------------------
def generate_indexes(length):
    start, end = [], []
    for i in range(1, length - 1):
        for j in range(i, length - 1):
            start.append(i)
            end.append(j)
    return (np.asarray(start, dtype=np.int32),
            np.asarray(end, dtype=np.int32))


def init_sic_params(key, hidden_size):
    # Deterministic nn.Linear-style init: U(-1/sqrt(H), 1/sqrt(H)).
    bound = 1.0 / np.sqrt(hidden_size)
    keys = jax.random.split(key, 8)
    params = {}
    for n, name in enumerate(("W_1", "W_2", "W_3", "W_4")):
        w = jax.random.uniform(keys[2 * n], (hidden_size, hidden_size),
                               jnp.float32, -bound, bound)   # (out, in)
        b = jax.random.uniform(keys[2 * n + 1], (hidden_size,),
                               jnp.float32, -bound, bound)
        params[name] = (w, b)
    return params


def sic_forward(params, hidden_states, mask, *, compute_dtype=None):
    """SICModel.forward.  compute_dtype=jnp.bfloat16 runs the MXU in bf16 and
    stores the projection in bf16 (recommended on v6e/v7x); None keeps the
    input dtype end to end."""
    B, S, H = hidden_states.shape

    # length = mask.sum(dim=1).max().item()  (host-side scalar, like PyTorch)
    # TODO(synk): this device->host sync + a fresh compile per distinct length
    # dominates serving latency; bucket/pad lengths upstream to fix.
    length = int(np.asarray(jnp.max(jnp.sum(mask, axis=1))))
    start_np, end_np = generate_indexes(length)
    P = int(start_np.shape[0])
    if P == 0:  # length <= 2 produces no spans
        return jnp.zeros((B, 0, H), dtype=hidden_states.dtype)

    w1, b1 = params["W_1"]
    w2, b2 = params["W_2"]
    w3, b3 = params["W_3"]
    w4, b4 = params["W_4"]
    # Fold the span linear-combine into the weights:
    #   start features [A|C] = x @ [W1^T+W3^T | W4^T] + [b1+b3 | b4]
    #   end   features [B|C] = x @ [W2^T-W3^T | W4^T] + [b2-b3 | b4]
    #   span = A_s + B_e + C_s * C_e
    w_fold = jnp.concatenate([(w1 + w3).T, w4.T, (w2 - w3).T, w4.T], axis=1)  # (H,4H)
    b_fold = jnp.concatenate([b1 + b3, b4, b2 - b3, b4], axis=0)              # (4H,)

    cdt = hidden_states.dtype if compute_dtype is None else compute_dtype

    # Seq-major input so the (S*B, 4H) result reshapes to (S, B, 4H) without
    # transposing the 4x-larger activation tensor.
    x_sb = jnp.transpose(hidden_states, (1, 0, 2)).reshape(S * B, H).astype(cdt)
    proj = fused_linear(x_sb, w_fold.astype(cdt),
                        b_fold.reshape(1, 4 * H).astype(jnp.float32))
    proj = proj.reshape(S, B, 4 * H)                                          # (S,B,4H)

    # Span gather + combine + tanh, emitted directly as (B, P, H).
    return span_classifier(proj, start_np, end_np,
                           out_dtype=hidden_states.dtype)


# ---------------- Reference (plain JAX) for sanity ---------------------------
def sic_forward_ref(params, hidden_states, mask):
    def lin(name, x):
        w, b = params[name]
        return x @ w.T + b
    W1_h = lin("W_1", hidden_states)
    W2_h = lin("W_2", hidden_states)
    W3_h = lin("W_3", hidden_states)
    W4_h = lin("W_4", hidden_states)
    length = int(np.asarray(jnp.max(jnp.sum(mask, axis=1))))
    s, e = generate_indexes(length)
    span = (W1_h[:, s] + W2_h[:, e]
            + (W3_h[:, s] - W3_h[:, e])
            + W4_h[:, s] * W4_h[:, e])
    return jnp.tanh(span)


if __name__ == "__main__":
    # H % 64 == 0 exercises the lane-aligned 2H-wide gather fast path.
    B, S, H = 2, 8, 64
    key = jax.random.PRNGKey(0)
    k_param, k_x = jax.random.split(key)

    params = init_sic_params(k_param, H)
    hidden_states = jax.random.normal(k_x, (B, S, H), dtype=jnp.float32)
    mask = jnp.ones((B, S), dtype=jnp.int32)

    ref = sic_forward_ref(params, hidden_states, mask)

    # f32 path (default): tight tolerance (folded weights differ from the
    # reference only by f32 associativity).
    out = jax.block_until_ready(sic_forward(params, hidden_states, mask))
    np.testing.assert_allclose(np.asarray(out), np.asarray(ref),
                               rtol=1e-4, atol=1e-4)

    # bf16 MXU + bf16-stored projection path (v6e/v7x recommendation):
    # expect bf16-level error pre-tanh, so loose tolerance.
    out_bf16 = jax.block_until_ready(
        sic_forward(params, hidden_states, mask, compute_dtype=jnp.bfloat16))
    np.testing.assert_allclose(np.asarray(out_bf16), np.asarray(ref),
                               rtol=1e-1, atol=1e-1)

    print("KERNEL_OK")
</pallas_src>

<mosaic_0001>
module attributes {stable_mosaic.version = 11 : i64} {
  func.func @_proj_kernel_f32(%arg0: i32, %arg1: i32, %arg2: i32, %arg3: memref<16x64xf32, #tpu.memory_space<vmem>>, %arg4: memref<64x256xf32, #tpu.memory_space<vmem>>, %arg5: memref<1x256xf32, #tpu.memory_space<vmem>>, %arg6: memref<16x256xf32, #tpu.memory_space<vmem>>) attributes {dimension_semantics = [#tpu.dimension_semantics<parallel>, #tpu.dimension_semantics<parallel>, #tpu.dimension_semantics<arbitrary>], iteration_bounds = array<i64: 1, 1, 1>, scalar_prefetch = 0 : i64, scratch_operands = 0 : i64, tpu.core_type = #tpu.core_type<tc>, window_params = [{transform_indices = @transform_0, window_bounds = array<i64: 16, 64>}, {transform_indices = @transform_1, window_bounds = array<i64: 64, 256>}, {transform_indices = @transform_2, window_bounds = array<i64: 1, 256>}, {transform_indices = @transform_3, window_bounds = array<i64: 16, 256>}]} {
    %c0_i32 = arith.constant 0 : i32
    %0 = arith.cmpi eq, %arg2, %c0_i32 : i32
    %1 = arith.extui %0 : i1 to i32
    %c0_i32_0 = arith.constant 0 : i32
    %2 = arith.cmpi ne, %1, %c0_i32_0 : i32
    scf.if %2 {
      %c0_8 = arith.constant 0 : index
      %c0_9 = arith.constant 0 : index
      %9 = vector.load %arg5[%c0_8, %c0_9] : memref<1x256xf32, #tpu.memory_space<vmem>>, vector<1x256xf32>
      %10 = vector.shape_cast %9 : vector<1x256xf32> to vector<1x256xf32>
      %11 = vector.broadcast %10 : vector<1x256xf32> to vector<16x256xf32>
      %c0_10 = arith.constant 0 : index
      %c0_11 = arith.constant 0 : index
      %12 = vector.load %arg6[%c0_10, %c0_11] : memref<16x256xf32, #tpu.memory_space<vmem>>, vector<16x256xf32>
      tpu.vector_store %arg6[%c0_10, %c0_11], %11 {strides = array<i32>} : memref<16x256xf32, #tpu.memory_space<vmem>>, vector<16x256xf32>,
    } else {
    }
    %c0 = arith.constant 0 : index
    %c0_1 = arith.constant 0 : index
    %3 = vector.load %arg6[%c0, %c0_1] : memref<16x256xf32, #tpu.memory_space<vmem>>, vector<16x256xf32>
    %c0_2 = arith.constant 0 : index
    %c0_3 = arith.constant 0 : index
    %4 = vector.load %arg3[%c0_2, %c0_3] : memref<16x64xf32, #tpu.memory_space<vmem>>, vector<16x64xf32>
    %c0_4 = arith.constant 0 : index
    %c0_5 = arith.constant 0 : index
    %5 = vector.load %arg4[%c0_4, %c0_5] : memref<64x256xf32, #tpu.memory_space<vmem>>, vector<64x256xf32>
    %cst = arith.constant dense<0.000000e+00> : vector<16x256xf32>
    %6 = tpu.matmul %4, %5, %cst {dimension_numbers = #tpu.dot_dimension_numbers<[1], [0], [0], [1], [0, 0, 1, 1], [], []>} : vector<16x64xf32>, vector<64x256xf32>, vector<16x256xf32> -> vector<16x256xf32>
    %7 = arith.addf %3, %6 : vector<16x256xf32>
    %c0_6 = arith.constant 0 : index
    %c0_7 = arith.constant 0 : index
    %8 = vector.load %arg6[%c0_6, %c0_7] : memref<16x256xf32, #tpu.memory_space<vmem>>, vector<16x256xf32>
    tpu.vector_store %arg6[%c0_6, %c0_7], %7 {strides = array<i32>} : memref<16x256xf32, #tpu.memory_space<vmem>>, vector<16x256xf32>,
    return
  }
  func.func @transform_0(%arg0: i32, %arg1: i32, %arg2: i32) -> (i32, i32) {
    %c0_i32 = arith.constant 0 : i32
    return %arg0, %arg2 : i32, i32
  }
  func.func @transform_1(%arg0: i32, %arg1: i32, %arg2: i32) -> (i32, i32) {
    %c0_i32 = arith.constant 0 : i32
    return %arg2, %arg1 : i32, i32
  }
  func.func @transform_2(%arg0: i32, %arg1: i32, %arg2: i32) -> (i32, i32) {
    %c0_i32 = arith.constant 0 : i32
    %c0_i32_0 = arith.constant 0 : i32
    return %c0_i32, %arg1 : i32, i32
  }
  func.func @transform_3(%arg0: i32, %arg1: i32, %arg2: i32) -> (i32, i32) {
    %c0_i32 = arith.constant 0 : i32
    return %arg0, %arg1 : i32, i32
  }
}

</mosaic_0001>

<llo_original>
// kernel: tpu_custom_call.1
$region0: #{tpu_custom_call.1}
  #allocation0 [shape = 'u32[]', space=smem, size = 0x4, offset = 0x4, fixed_abs, tag = 'smem constant byte address 0x4 - core index']
  #allocation1 [shape = 'u32[72,128]{1,0:T(1,128)}', space=vmem, size = 0x9000, scoped, tag = 'internal scratch']
  %s0 = inlined_call_operand.hbm [shape: f32[16,64], index: 0, kind: input, shape index: {}]
  %s1 = inlined_call_operand.hbm [shape: f32[64,256], index: 1, kind: input, shape index: {}]
  %s2 = inlined_call_operand.hbm [shape: f32[1,256], index: 2, kind: input, shape index: {}]
  %s3 = inlined_call_operand.hbm [shape: f32[16,256], index: 3, kind: output, shape index: {}]
  %s4 = sld [smem:[#allocation0]]
  $region38: #{tpu_custom_call.1} parent=0
    _
  %s6 = ssub.s32 1, %s4
  %s7 = scalar_select 0, %s6, %s4
  $region1: #{tpu_custom_call.1} parent=0
    #allocation2 [shape = 'u8[8192]{0}', space=vmem, size = 0x2000, scoped, tag = 'input window, operand 0, single buffered']
    #allocation3 [shape = 's32[1]{0}', space=sflag, size = 0x4, scoped, tag = 'scoped memory for tpu_custom_call.1']
    #allocation4 [shape = 's32[1]{0}', space=sflag, size = 0x4, scoped, tag = 'scoped memory for tpu_custom_call.1']
    #allocation5 [shape = 'u8[65536]{0}', space=vmem, size = 0x10000, scoped, tag = 'input window, operand 1, single buffered']
    #allocation6 [shape = 's32[1]{0}', space=sflag, size = 0x4, scoped, tag = 'scoped memory for tpu_custom_call.1']
    #allocation7 [shape = 'u8[1024]{0}', space=vmem, size = 0x400, scoped, tag = 'input window, operand 2, single buffered']
    #allocation8 [shape = 'u8[16384]{0}', space=vmem, size = 0x4000, scoped, tag = 'output window, operand 0, single buffered']
    %8 = vsyncpa [#allocation3], 0
    %9 = vsyncpa [#allocation6], 0
    %10 = vsyncpa [#allocation4], 0
    // Predicated region
    $region2: #{tpu_custom_call.1} parent=1 // pred_check
      _
    $region3: #{tpu_custom_call.1} parent=1 // pred_check_branch
      %12 = sbr.rel (0) target = $region5
    $region4: #{tpu_custom_call.1} parent=1 // pred_region
      %14 = vsyncadd [#allocation3], 0
      %s15 = sshll.u32 %s0, 4
      %s16 = int_to_ptr.hbm [resolvable:$true] %s15
      %s17 = sshll.u32 [#allocation2], 4
      %s18 = int_to_ptr.vmem [resolvable:$true] %s17
      %23 = dma.hbm_to_vmem [thread:$0]  %s16, 256, %s18, [#allocation3], 128, 128, 8
    $region5: #{tpu_custom_call.1} parent=1 // pred_fallthru
      _
    // Predicated region
    $region6: #{tpu_custom_call.1} parent=1 // pred_check
      _
    $region7: #{tpu_custom_call.1} parent=1 // pred_check_branch
      %25 = sbr.rel (0) target = $region9
    $region8: #{tpu_custom_call.1} parent=1 // pred_region
      %27 = vsyncadd [#allocation6], 0
      %s28 = sshll.u32 %s1, 4
      %s29 = int_to_ptr.hbm [resolvable:$true] %s28
      %s30 = sshll.u32 [#allocation5], 4
      %s31 = int_to_ptr.vmem [resolvable:$true] %s30
      %36 = dma.hbm_to_vmem [thread:$0]  %s29, 2048, %s31, [#allocation6], 256, 256, 16
    $region9: #{tpu_custom_call.1} parent=1 // pred_fallthru
      _
    // Predicated region
    $region10: #{tpu_custom_call.1} parent=1 // pred_check
      _
    $region11: #{tpu_custom_call.1} parent=1 // pred_check_branch
      %38 = sbr.rel (0) target = $region13
    $region12: #{tpu_custom_call.1} parent=1 // pred_region
      %40 = vsyncadd [#allocation6], 0
      %s42 = sshll.u32 %s2, 4
      %s43 = int_to_ptr.hbm [resolvable:$true] %s42
      %s44 = sshll.u32 [#allocation7], 4
      %s45 = int_to_ptr.vmem [resolvable:$true] %s44
      %47 = dma.hbm_to_vmem [thread:$0]  %s43, 32, %s45, [#allocation6]
    $region13: #{tpu_custom_call.1} parent=1 // pred_fallthru
      _
    // Predicated region
    $region14: #{tpu_custom_call.1} parent=1 // pred_check
      _
    $region15: #{tpu_custom_call.1} parent=1 // pred_check_branch
      %49 = sbr.rel (0) target = $region17
    $region16: #{tpu_custom_call.1} parent=1 // pred_region
      %51 = dma.done [#allocation3], 256
    $region17: #{tpu_custom_call.1} parent=1 // pred_fallthru
      _
    // Predicated region
    $region18: #{tpu_custom_call.1} parent=1 // pred_check
      _
    $region19: #{tpu_custom_call.1} parent=1 // pred_check_branch
      %53 = sbr.rel (0) target = $region21
    $region20: #{tpu_custom_call.1} parent=1 // pred_region
      %55 = dma.done [#allocation6], 2048
    $region21: #{tpu_custom_call.1} parent=1 // pred_fallthru
      _
    // Predicated region
    $region22: #{tpu_custom_call.1} parent=1 // pred_check
      _
    $region23: #{tpu_custom_call.1} parent=1 // pred_check_branch
      %57 = sbr.rel (0) target = $region25
    $region24: #{tpu_custom_call.1} parent=1 // pred_region
      %59 = dma.done [#allocation6], 32
    $region25: #{tpu_custom_call.1} parent=1 // pred_fallthru
      _
    %p60 = scmp.eq.s32.totalorder 0, 0
    // Predicated region
    $region26: #{tpu_custom_call.1} parent=1 // pred_check
      %p61 = pneg %p60
    $region27: #{tpu_custom_call.1} parent=1 // pred_check_branch
      %63 = sbr.rel (%p61) target = $region29
    $region28: #{tpu_custom_call.1} parent=1 // pred_region
      %v64 = vld [vmem:[#allocation7] sm:$0x3]
      %v66 = vperm.slane %v64, 0
      %v67 = vperm.slane %v64, 1
      %70 = vst [vmem:[#allocation8] sm:$0xff] %v66
      %71 = vst [vmem:[#allocation8 + $0x8] sm:$0xff] %v67
      %72 = vst [vmem:[#allocation8 + $0x10] sm:$0xff] %v66
      %73 = vst [vmem:[#allocation8 + $0x18] sm:$0xff] %v67
    $region29: #{tpu_custom_call.1} parent=1 // pred_fallthru
      _
    %v74 = vld [vmem:[#allocation8] sm:$0xff]
    %v75 = vld [vmem:[#allocation8 + $0x8] sm:$0xff]
    %v76 = vld [vmem:[#allocation8 + $0x10] sm:$0xff]
    %v77 = vld [vmem:[#allocation8 + $0x18] sm:$0xff]
    %v78 = vld [vmem:[#allocation2] sm:$0xff]
    %v79 = vld [vmem:[#allocation2 + $0x8] sm:$0xff]
    %v80 = vld [vmem:[#allocation5] sm:$0xff]
    %v81 = vld [vmem:[#allocation5 + $0x8] sm:$0xff]
    %v82 = vld [vmem:[#allocation5 + $0x10] sm:$0xff]
    %v83 = vld [vmem:[#allocation5 + $0x18] sm:$0xff]
    %v84 = vld [vmem:[#allocation5 + $0x20] sm:$0xff]
    %v85 = vld [vmem:[#allocation5 + $0x28] sm:$0xff]
    %v86 = vld [vmem:[#allocation5 + $0x30] sm:$0xff]
    %v87 = vld [vmem:[#allocation5 + $0x38] sm:$0xff]
    %v88 = vld [vmem:[#allocation5 + $0x40] sm:$0xff]
    %v89 = vld [vmem:[#allocation5 + $0x48] sm:$0xff]
    %v90 = vld [vmem:[#allocation5 + $0x50] sm:$0xff]
    %v91 = vld [vmem:[#allocation5 + $0x58] sm:$0xff]
    %v92 = vld [vmem:[#allocation5 + $0x60] sm:$0xff]
    %v93 = vld [vmem:[#allocation5 + $0x68] sm:$0xff]
    %v94 = vld [vmem:[#allocation5 + $0x70] sm:$0xff]
    %v95 = vld [vmem:[#allocation5 + $0x78] sm:$0xff]
    %vm96 = vcmask 523264
    %v98 = vsel %vm96, %v78, 0
    %v101 = vsel %vm96, %v79, 0
    %103 = vmatpush.msra.mxu0 0.0
    %104 = vmatpush.msra.mxu0 0.0
    %105 = vmatpush.msra.mxu0 0.0
    %106 = vmatpush.msra.mxu0 0.0
    %107 = vmatpush.msra.mxu0 0.0
    %108 = vmatpush.msra.mxu0 0.0
    %109 = vmatpush.msra.mxu0 0.0
    %110 = vmatpush.msra.mxu0 0.0
    %111 = vmatpush.msra.mxu0 %v94
    %112 = vmatpush.msra.mxu0 %v92
    %113 = vmatpush.msra.mxu0 %v90
    %114 = vmatpush.msra.mxu0 %v88
    %115 = vmatpush.msra.mxu0 %v86
    %116 = vmatpush.msra.mxu0 %v84
    %117 = vmatpush.msra.mxu0 %v82
    %118 = vmatpush.msra.mxu0 %v80
    %119 = vmatmul.f32.gmra.mxu0 %v98
    %v120 = vpop.f32.mrf.mxu0
    %v121 = vadd.f32 0.0, %v120
    %122 = vmatmul.f32.gmra.mxu0 %v101
    %v123 = vpop.f32.mrf.mxu0
    %v124 = vadd.f32 0.0, %v123
    %125 = vdwg.mxu0
    %126 = vmatpush.msra.mxu0 0.0
    %127 = vmatpush.msra.mxu0 0.0
    %128 = vmatpush.msra.mxu0 0.0
    %129 = vmatpush.msra.mxu0 0.0
    %130 = vmatpush.msra.mxu0 0.0
    %131 = vmatpush.msra.mxu0 0.0
    %132 = vmatpush.msra.mxu0 0.0
    %133 = vmatpush.msra.mxu0 0.0
    %134 = vmatpush.msra.mxu0 %v95
    %135 = vmatpush.msra.mxu0 %v93
    %136 = vmatpush.msra.mxu0 %v91
    %137 = vmatpush.msra.mxu0 %v89
    %138 = vmatpush.msra.mxu0 %v87
    %139 = vmatpush.msra.mxu0 %v85
    %140 = vmatpush.msra.mxu0 %v83
    %141 = vmatpush.msra.mxu0 %v81
    %142 = vmatmul.f32.gmra.mxu0 %v98
    %v143 = vpop.f32.mrf.mxu0
    %v144 = vadd.f32 0.0, %v143
    %145 = vmatmul.f32.gmra.mxu0 %v101
    %v146 = vpop.f32.mrf.mxu0
    %v147 = vadd.f32 0.0, %v146
    %148 = vdwg.mxu0
    %v149 = vadd.f32 %v74, %v121
    %v150 = vadd.f32 %v75, %v144
    %v151 = vadd.f32 %v76, %v124
    %v152 = vadd.f32 %v77, %v147
    %153 = vst [vmem:[#allocation8] sm:$0xff] %v149
    %154 = vst [vmem:[#allocation8 + $0x8] sm:$0xff] %v150
    %155 = vst [vmem:[#allocation8 + $0x10] sm:$0xff] %v151
    %156 = vst [vmem:[#allocation8 + $0x18] sm:$0xff] %v152
    // Predicated region
    $region30: #{tpu_custom_call.1} parent=1 // pred_check
      _
    $region31: #{tpu_custom_call.1} parent=1 // pred_check_branch
      %158 = sbr.rel (0) target = $region33
    $region32: #{tpu_custom_call.1} parent=1 // pred_region
      %160 = vsyncadd [#allocation4], 0
      %s161 = sshll.u32 [#allocation8], 4
      %s162 = int_to_ptr.vmem [resolvable:$true] %s161
      %s163 = sshll.u32 %s3, 4
      %s164 = int_to_ptr.hbm [resolvable:$true] %s163
      %169 = dma.vmem_to_hbm [thread:$0]  %s162, 512, %s164, [#allocation4], 256, 256, 16
    $region33: #{tpu_custom_call.1} parent=1 // pred_fallthru
      _
    // Predicated region
    $region34: #{tpu_custom_call.1} parent=1 // pred_check
      _
    $region35: #{tpu_custom_call.1} parent=1 // pred_check_branch
      %171 = sbr.rel (0) target = $region37
    $region36: #{tpu_custom_call.1} parent=1 // pred_region
      %173 = dma.done [#allocation4], 512
    $region37: #{tpu_custom_call.1} parent=1 // pred_fallthru
      _
    %174 = vsyncpa [#allocation3], 1
    %175 = vsyncpa [#allocation6], 1
    %176 = vsyncpa [#allocation4], 1

</llo_original>
